<compile_context>
chip_gen: v7x
topology: tpu7x:2x2x1
jax: 0.10.0
libtpu: 0.0.40
codegen_flags: <defaults>
</compile_context>

<pallas_src>
import functools

import jax
import jax.numpy as jnp
from jax.experimental import pallas as pl
from jax.experimental.pallas import tpu as pltpu  # noqa: F401

N_BINS = 4    # AdaptiveMaxPool1d(4)
KCONV = 3     # Conv1d kernel_size


def _bin_edges(length, n_bins):
    """Static AdaptiveMaxPool1d bin boundaries (PyTorch's floor/ceil formula)."""
    return [((i * length) // n_bins, -(-((i + 1) * length) // n_bins))
            for i in range(n_bins)]


# --------------------------------------------------------------------------- #
# one-time parameter preprocessing: fold Embedding@Conv1d into lookup tables,  #
# pack both branches into one lane-dense weight, permute inter_dense rows.     #
# --------------------------------------------------------------------------- #
def preprocess_params(raw, n_bins=N_BINS):
    n_tok = raw["title_emb"].shape[0]
    cout = raw["title_conv_w"].shape[0]

    # Embedding -> Conv1d(k=3) is linear in the one-hot token encoding, so fold
    # emb @ W_k offline:  conv[b, p, o] = bias[o] + sum_k tbl_k[tok[b, p+k], o].
    def conv_tables(emb, w):   # emb (n_tok, cin) f32, w (cout, cin, 3) torch layout
        return jnp.concatenate(
            [jnp.dot(emb, w[:, :, k].T, precision="highest") for k in range(KCONV)],
            axis=0)                                            # (3*n_tok, cout)

    # Both branches share the K axis (row = k*n_tok + token); title occupies lanes
    # [0, cout), full occupies [cout, 2*cout)  ->  one (150, 128) MXU weight.
    conv_tbl = jnp.concatenate(
        [conv_tables(raw["title_emb"], raw["title_conv_w"]),
         conv_tables(raw["full_emb"], raw["full_conv_w"])],
        axis=1).astype(jnp.bfloat16)
    conv_b = jnp.concatenate([raw["title_conv_b"], raw["full_conv_b"]]
                             ).reshape(1, 2 * cout).astype(jnp.float32)

    # inter_dense rows, permuted to the kernel's pooled layout:
    #   kernel column q = j*(2*cout) + c          (title chan c, bin j)
    #                   = j*(2*cout) + cout + c   (full  chan c, bin j)
    #   torch feature  f = c*4 + j  /  cout*4 + c*4 + j  /  2*cout*4 + c (category)
    w1 = raw["inter_w"].T                                      # (concat_features, hid//2)
    perm = []
    for j in range(n_bins):
        perm += [c * n_bins + j for c in range(cout)]                   # title, bin j
        perm += [cout * n_bins + c * n_bins + j for c in range(cout)]   # full,  bin j
    w1_pool = w1[jnp.asarray(perm, dtype=jnp.int32), :]        # (2*cout*n_bins, hid//2)
    w1_cat = w1[2 * cout * n_bins:, :]                         # (cout, hid//2)

    return {
        "conv_tbl": conv_tbl,                                  # (3*n_tok, 2*cout) bf16
        "conv_b": conv_b,                                      # (1, 2*cout)       f32
        "cat_w": raw["cat_w"].T.astype(jnp.bfloat16),          # (n_cat, cout)
        "cat_b": raw["cat_b"].reshape(1, cout).astype(jnp.float32),
        "w1_pool": w1_pool.astype(jnp.bfloat16),               # (2*cout*n_bins, hid//2)
        "w1_cat": w1_cat.astype(jnp.bfloat16),                 # (cout, hid//2)
        "b1": raw["inter_b"].reshape(1, -1).astype(jnp.float32),
        "w2": raw["final_w"].astype(jnp.float32),              # (1, hid//2)
        "b2": raw["final_b"].reshape(1, 1).astype(jnp.float32),
    }


# --------------------------------------------------------------------------- #
# fused kernel: gather+conv (x2, one matmul) + pool + category + MLP head      #
# --------------------------------------------------------------------------- #
def fused_forward_kernel(hot_ref, x3_ref, tbl_ref, bconv_ref, wc_ref, bc_ref,
                         w1p_ref, w1c_ref, b1_ref, w2_ref, b2_ref, o_ref,
                         *, batch, l_out_t, l_out_f, n_bins, k_onehot, lanes):
    m = (l_out_t + l_out_f) * batch
    half = lanes // 2                                          # = Cout per branch

    # ---- in-kernel embedding gather + BOTH conv branches: one MXU matmul -------
    hot = hot_ref[...]                                         # (M, 3) int32 tap ids
    lane_k = jax.lax.broadcasted_iota(jnp.int32, (m, k_onehot), 1)
    mask = ((lane_k == hot[:, 0:1]) | (lane_k == hot[:, 1:2]) |
            (lane_k == hot[:, 2:3]))
    onehot = jnp.where(mask, 1.0, 0.0).astype(jnp.bfloat16)    # exact 0/1 multi-hot
    r = jnp.dot(onehot, tbl_ref[...], preferred_element_type=jnp.float32)
    r = jnp.maximum(r + bconv_ref[...], 0.0)                   # (M, lanes) f32, post-ReLU
    # title conv: rows [0, l_out_t*B), lanes [0, half); full conv: rest, lanes [half, lanes)

    # ---- batch-vectorized AdaptiveMaxPool1d(n_bins) -----------------------------
    # Rows are position-major (row = pos*B + b), so each position is a contiguous
    # (B, lanes) slab and pooling is a handful of elementwise VPU maxes:
    # no per-batch loop, no XLU sublane reductions, op count independent of B.
    def span_max(base, s, e):
        acc = r[(base + s) * batch:(base + s + 1) * batch, :]
        for p in range(s + 1, e):
            acc = jnp.maximum(acc, r[(base + p) * batch:(base + p + 1) * batch, :])
        return acc                                             # (B, lanes)

    bins_t = _bin_edges(l_out_t, n_bins)
    bins_f = _bin_edges(l_out_f, n_bins)
    is_title_lane = jax.lax.broadcasted_iota(jnp.int32, (batch, lanes), 1) < half
    pooled = []
    for j in range(n_bins):
        t_max = span_max(0, *bins_t[j])                        # valid lanes [0, half)
        f_max = span_max(l_out_t, *bins_f[j])                  # valid lanes [half, lanes)
        # bin-j slab: [title bin-j channels | full bin-j channels], 128-lane aligned
        pooled.append(jnp.where(is_title_lane, t_max, f_max))
    pooled = jnp.concatenate(pooled, axis=-1)                  # (B, n_bins*lanes) f32

    # ---- category branch --------------------------------------------------------
    cat = jnp.dot(x3_ref[...], wc_ref[...], preferred_element_type=jnp.float32)
    cat = jnp.maximum(cat + bc_ref[...], 0.0)                  # (B, half) f32

    # ---- inter_dense as partial-K matmuls (the 576-lane concat is gone) ---------
    h1 = jnp.dot(pooled.astype(jnp.bfloat16), w1p_ref[...],
                 preferred_element_type=jnp.float32)
    h1 = h1 + jnp.dot(cat.astype(jnp.bfloat16), w1c_ref[...],
                      preferred_element_type=jnp.float32)
    h1 = jnp.maximum(h1 + b1_ref[...], 0.0)                    # (B, hid//2) f32

    # ---- final_dense (hid//2 -> 1): VPU multiply + lane reduce (no N=1 matmul) --
    o_ref[...] = jnp.sum(h1 * w2_ref[...], axis=-1, keepdims=True) + b2_ref[...]


# --------------------------------------------------------------------------- #
# forward-pass wrapper: one grid-less pallas_call, all operands tiny VMEM blobs #
# --------------------------------------------------------------------------- #
def three_inputs_net_forward(pp, input1, input2, input3):
    B, L1 = input1.shape
    L2 = input2.shape[1]
    l_out_t, l_out_f = L1 - (KCONV - 1), L2 - (KCONV - 1)
    if l_out_t < 1 or l_out_f < 1:
        raise ValueError("sequence too short for kernel_size=3 conv")
    n_tok = pp["conv_tbl"].shape[0] // KCONV
    lanes = pp["conv_tbl"].shape[1]                            # 2*Cout

    def tap_ids(tokens, l_out):
        # (B, L) int32 -> (l_out*B, 3) int32 tap ids, position-major rows
        # (row = pos*B + b); tap k is offset by k*n_tok so the three one-hot
        # blocks share one K axis.  This tiny int32 slab is the only per-step
        # activation traffic: the float embedding gather / im2col never touches HBM.
        taps = jnp.stack([tokens[:, k:k + l_out] + k * n_tok for k in range(KCONV)],
                         axis=-1)                              # (B, l_out, 3)
        return jnp.transpose(taps, (1, 0, 2)).reshape(l_out * B, KCONV).astype(jnp.int32)

    hot = jnp.concatenate([tap_ids(input1, l_out_t), tap_ids(input2, l_out_f)], axis=0)

    kern = functools.partial(
        fused_forward_kernel, batch=B, l_out_t=l_out_t, l_out_f=l_out_f,
        n_bins=N_BINS, k_onehot=KCONV * n_tok, lanes=lanes)

    # Single un-gridded call (default full-array VMEM blocks).  At production batch
    # sizes: add a batch grid over the position-major rows (parallel semantics for
    # v7x's two TensorCores), size the batch tile for v7x's 64 MiB VMEM, and emit
    # the output batch-on-lanes; at B=2 a grid would only add per-step overhead.
    return pl.pallas_call(
        kern,
        out_shape=jax.ShapeDtypeStruct((B, 1), jnp.float32),
    )(hot, input3.astype(jnp.bfloat16),
      pp["conv_tbl"], pp["conv_b"], pp["cat_w"], pp["cat_b"],
      pp["w1_pool"], pp["w1_cat"], pp["b1"], pp["w2"], pp["b2"])


# --------------------------------------------------------------------------- #
# pure-JAX f32 reference with the original torch op structure                  #
# --------------------------------------------------------------------------- #
def ref_forward(raw, input1, input2, input3, n_bins=N_BINS):
    hp = "highest"

    def branch(tokens, emb, w, b):
        x = emb[tokens]                                        # (B, L, Cin) f32
        l_out = x.shape[1] - (KCONV - 1)
        y = sum(jnp.einsum("blc,oc->blo", x[:, k:k + l_out, :], w[:, :, k],
                           precision=hp) for k in range(KCONV))
        y = jax.nn.relu(y + b[None, None, :])                  # (B, l_out, Cout)
        pooled = jnp.stack([jnp.max(y[:, s:e, :], axis=1)
                            for s, e in _bin_edges(l_out, n_bins)], axis=2)
        return pooled.reshape(x.shape[0], -1)                  # torch .view(B, -1) order

    title = branch(input1, raw["title_emb"], raw["title_conv_w"], raw["title_conv_b"])
    full = branch(input2, raw["full_emb"], raw["full_conv_w"], raw["full_conv_b"])
    cat = jax.nn.relu(jnp.dot(input3, raw["cat_w"].T, precision=hp) + raw["cat_b"])
    concat = jnp.concatenate([title, full, cat], axis=1)
    h = jax.nn.relu(jnp.dot(concat, raw["inter_w"].T, precision=hp) + raw["inter_b"])
    return jnp.dot(h, raw["final_w"].T, precision=hp) + raw["final_b"]


# --------------------------------------------------------------------------- #
# main                                                                          #
# --------------------------------------------------------------------------- #
if __name__ == "__main__":
    B = 2
    hid = 32
    n_tokens = 50
    n_cat_features = 16
    L1, L2 = 8, 12
    concat_number_of_features = 2 * hid * 4 + 2 * hid * 4 + 2 * hid   # 576

    key = jax.random.PRNGKey(0)
    ks = jax.random.split(key, 16)

    def unif(k, shape, fan_in):
        bound = 1.0 / jnp.sqrt(fan_in)
        return jax.random.uniform(k, shape, jnp.float32, -bound, bound)

    raw = {
        "title_emb": jax.random.normal(ks[0], (n_tokens, hid), jnp.float32),
        "full_emb": jax.random.normal(ks[1], (n_tokens, hid), jnp.float32),
        "title_conv_w": unif(ks[2], (2 * hid, hid, 3), hid * 3),
        "title_conv_b": unif(ks[3], (2 * hid,), hid * 3),
        "full_conv_w": unif(ks[4], (2 * hid, hid, 3), hid * 3),
        "full_conv_b": unif(ks[5], (2 * hid,), hid * 3),
        "cat_w": unif(ks[6], (2 * hid, n_cat_features), n_cat_features),
        "cat_b": unif(ks[7], (2 * hid,), n_cat_features),
        "inter_w": unif(ks[8], (hid // 2, concat_number_of_features),
                        concat_number_of_features),
        "inter_b": unif(ks[9], (hid // 2,), concat_number_of_features),
        "final_w": unif(ks[10], (1, hid // 2), hid // 2),
        "final_b": unif(ks[11], (1,), hid // 2),
    }

    input1 = jax.random.randint(ks[12], (B, L1), 0, n_tokens, dtype=jnp.int32)
    input2 = jax.random.randint(ks[13], (B, L2), 0, n_tokens, dtype=jnp.int32)
    input3 = jax.random.normal(ks[14], (B, n_cat_features), jnp.float32)

    pp = preprocess_params(raw)                     # one-time fold/permute/cast
    fwd = jax.jit(three_inputs_net_forward)
    out = jax.block_until_ready(fwd(pp, input1, input2, input3))

    ref = ref_forward(raw, input1, input2, input3)
    assert out.shape == (B, 1), out.shape
    # Kernel matmul operands are bf16 (MXU-native, f32 accumulation); the reference
    # is pure f32 torch semantics, so the tolerance reflects bf16 input quantization.
    assert jnp.allclose(out, ref, atol=2e-2, rtol=2e-2), (out, ref)

    print("KERNEL_OK")
</pallas_src>

<mosaic_0001>
module attributes {stable_mosaic.version = 11 : i64} {
  func.func @fused_forward_kernel(%arg0: memref<32x3xi32, #tpu.memory_space<vmem>>, %arg1: memref<2x16xbf16, #tpu.memory_space<vmem>>, %arg2: memref<150x128xbf16, #tpu.memory_space<vmem>>, %arg3: memref<1x128xf32, #tpu.memory_space<vmem>>, %arg4: memref<16x64xbf16, #tpu.memory_space<vmem>>, %arg5: memref<1x64xf32, #tpu.memory_space<vmem>>, %arg6: memref<512x16xbf16, #tpu.memory_space<vmem>>, %arg7: memref<64x16xbf16, #tpu.memory_space<vmem>>, %arg8: memref<1x16xf32, #tpu.memory_space<vmem>>, %arg9: memref<1x16xf32, #tpu.memory_space<vmem>>, %arg10: memref<1x1xf32, #tpu.memory_space<vmem>>, %arg11: memref<2x1xf32, #tpu.memory_space<vmem>>) attributes {dimension_semantics = [], scalar_prefetch = 0 : i64, scratch_operands = 0 : i64, tpu.core_type = #tpu.core_type<tc>} {
    %c0 = arith.constant 0 : index
    %c0_0 = arith.constant 0 : index
    %0 = vector.load %arg0[%c0, %c0_0] : memref<32x3xi32, #tpu.memory_space<vmem>>, vector<32x3xi32>
    %1 = tpu.iota {dimensions = array<i32: 1>} : vector<32x150xi32>
    %2 = vector.extract_strided_slice %0 {offsets = [0, 0], sizes = [32, 1], strides = [1, 1]} : vector<32x3xi32> to vector<32x1xi32>
    %3 = vector.broadcast %2 : vector<32x1xi32> to vector<32x150xi32>
    %4 = arith.cmpi eq, %1, %3 : vector<32x150xi32>
    %5 = vector.extract_strided_slice %0 {offsets = [0, 1], sizes = [32, 1], strides = [1, 1]} : vector<32x3xi32> to vector<32x1xi32>
    %6 = vector.broadcast %5 : vector<32x1xi32> to vector<32x150xi32>
    %7 = arith.cmpi eq, %1, %6 : vector<32x150xi32>
    %8 = arith.ori %4, %7 : vector<32x150xi1>
    %9 = vector.extract_strided_slice %0 {offsets = [0, 2], sizes = [32, 1], strides = [1, 1]} : vector<32x3xi32> to vector<32x1xi32>
    %10 = vector.broadcast %9 : vector<32x1xi32> to vector<32x150xi32>
    %11 = arith.cmpi eq, %1, %10 : vector<32x150xi32>
    %12 = arith.ori %8, %11 : vector<32x150xi1>
    %cst = arith.constant 1.000000e+00 : f32
    %cst_1 = arith.constant 0.000000e+00 : f32
    %13 = vector.broadcast %cst : f32 to vector<32x150xf32>
    %14 = vector.broadcast %cst_1 : f32 to vector<32x150xf32>
    %15 = arith.select %12, %13, %14 : vector<32x150xi1>, vector<32x150xf32>
    %16 = arith.truncf %15 : vector<32x150xf32> to vector<32x150xbf16>
    %c0_2 = arith.constant 0 : index
    %c0_3 = arith.constant 0 : index
    %17 = vector.load %arg2[%c0_2, %c0_3] : memref<150x128xbf16, #tpu.memory_space<vmem>>, vector<150x128xbf16>
    %cst_4 = arith.constant dense<0.000000e+00> : vector<32x128xf32>
    %18 = tpu.matmul %16, %17, %cst_4 {dimension_numbers = #tpu.dot_dimension_numbers<[1], [0], [0], [1], [0, 0, 1, 1], [], []>} : vector<32x150xbf16>, vector<150x128xbf16>, vector<32x128xf32> -> vector<32x128xf32>
    %c0_5 = arith.constant 0 : index
    %c0_6 = arith.constant 0 : index
    %19 = vector.load %arg3[%c0_5, %c0_6] : memref<1x128xf32, #tpu.memory_space<vmem>>, vector<1x128xf32>
    %20 = vector.broadcast %19 : vector<1x128xf32> to vector<32x128xf32>
    %21 = arith.addf %18, %20 : vector<32x128xf32>
    %cst_7 = arith.constant 0.000000e+00 : f32
    %22 = vector.broadcast %cst_7 : f32 to vector<32x128xf32>
    %23 = arith.maximumf %21, %22 : vector<32x128xf32>
    %24 = tpu.iota {dimensions = array<i32: 1>} : vector<2x128xi32>
    %c64_i32 = arith.constant 64 : i32
    %25 = vector.broadcast %c64_i32 : i32 to vector<2x128xi32>
    %26 = arith.cmpi slt, %24, %25 : vector<2x128xi32>
    %27 = vector.extract_strided_slice %23 {offsets = [0, 0], sizes = [2, 128], strides = [1, 1]} : vector<32x128xf32> to vector<2x128xf32>
    %28 = vector.extract_strided_slice %23 {offsets = [2, 0], sizes = [2, 128], strides = [1, 1]} : vector<32x128xf32> to vector<2x128xf32>
    %29 = arith.maximumf %27, %28 : vector<2x128xf32>
    %30 = vector.extract_strided_slice %23 {offsets = [12, 0], sizes = [2, 128], strides = [1, 1]} : vector<32x128xf32> to vector<2x128xf32>
    %31 = vector.extract_strided_slice %23 {offsets = [14, 0], sizes = [2, 128], strides = [1, 1]} : vector<32x128xf32> to vector<2x128xf32>
    %32 = arith.maximumf %30, %31 : vector<2x128xf32>
    %33 = vector.extract_strided_slice %23 {offsets = [16, 0], sizes = [2, 128], strides = [1, 1]} : vector<32x128xf32> to vector<2x128xf32>
    %34 = arith.maximumf %32, %33 : vector<2x128xf32>
    %35 = arith.select %26, %29, %34 : vector<2x128xi1>, vector<2x128xf32>
    %36 = vector.extract_strided_slice %23 {offsets = [2, 0], sizes = [2, 128], strides = [1, 1]} : vector<32x128xf32> to vector<2x128xf32>
    %37 = vector.extract_strided_slice %23 {offsets = [4, 0], sizes = [2, 128], strides = [1, 1]} : vector<32x128xf32> to vector<2x128xf32>
    %38 = arith.maximumf %36, %37 : vector<2x128xf32>
    %39 = vector.extract_strided_slice %23 {offsets = [16, 0], sizes = [2, 128], strides = [1, 1]} : vector<32x128xf32> to vector<2x128xf32>
    %40 = vector.extract_strided_slice %23 {offsets = [18, 0], sizes = [2, 128], strides = [1, 1]} : vector<32x128xf32> to vector<2x128xf32>
    %41 = arith.maximumf %39, %40 : vector<2x128xf32>
    %42 = vector.extract_strided_slice %23 {offsets = [20, 0], sizes = [2, 128], strides = [1, 1]} : vector<32x128xf32> to vector<2x128xf32>
    %43 = arith.maximumf %41, %42 : vector<2x128xf32>
    %44 = arith.select %26, %38, %43 : vector<2x128xi1>, vector<2x128xf32>
    %45 = vector.extract_strided_slice %23 {offsets = [6, 0], sizes = [2, 128], strides = [1, 1]} : vector<32x128xf32> to vector<2x128xf32>
    %46 = vector.extract_strided_slice %23 {offsets = [8, 0], sizes = [2, 128], strides = [1, 1]} : vector<32x128xf32> to vector<2x128xf32>
    %47 = arith.maximumf %45, %46 : vector<2x128xf32>
    %48 = vector.extract_strided_slice %23 {offsets = [22, 0], sizes = [2, 128], strides = [1, 1]} : vector<32x128xf32> to vector<2x128xf32>
    %49 = vector.extract_strided_slice %23 {offsets = [24, 0], sizes = [2, 128], strides = [1, 1]} : vector<32x128xf32> to vector<2x128xf32>
    %50 = arith.maximumf %48, %49 : vector<2x128xf32>
    %51 = vector.extract_strided_slice %23 {offsets = [26, 0], sizes = [2, 128], strides = [1, 1]} : vector<32x128xf32> to vector<2x128xf32>
    %52 = arith.maximumf %50, %51 : vector<2x128xf32>
    %53 = arith.select %26, %47, %52 : vector<2x128xi1>, vector<2x128xf32>
    %54 = vector.extract_strided_slice %23 {offsets = [8, 0], sizes = [2, 128], strides = [1, 1]} : vector<32x128xf32> to vector<2x128xf32>
    %55 = vector.extract_strided_slice %23 {offsets = [10, 0], sizes = [2, 128], strides = [1, 1]} : vector<32x128xf32> to vector<2x128xf32>
    %56 = arith.maximumf %54, %55 : vector<2x128xf32>
    %57 = vector.extract_strided_slice %23 {offsets = [26, 0], sizes = [2, 128], strides = [1, 1]} : vector<32x128xf32> to vector<2x128xf32>
    %58 = vector.extract_strided_slice %23 {offsets = [28, 0], sizes = [2, 128], strides = [1, 1]} : vector<32x128xf32> to vector<2x128xf32>
    %59 = arith.maximumf %57, %58 : vector<2x128xf32>
    %60 = vector.extract_strided_slice %23 {offsets = [30, 0], sizes = [2, 128], strides = [1, 1]} : vector<32x128xf32> to vector<2x128xf32>
    %61 = arith.maximumf %59, %60 : vector<2x128xf32>
    %62 = arith.select %26, %56, %61 : vector<2x128xi1>, vector<2x128xf32>
    %63 = tpu.concatenate %35, %44, %53, %62 in 1 : vector<2x128xf32>, vector<2x128xf32>, vector<2x128xf32>, vector<2x128xf32> -> vector<2x512xf32>
    %c0_8 = arith.constant 0 : index
    %c0_9 = arith.constant 0 : index
    %64 = vector.load %arg1[%c0_8, %c0_9] : memref<2x16xbf16, #tpu.memory_space<vmem>>, vector<2x16xbf16>
    %c0_10 = arith.constant 0 : index
    %c0_11 = arith.constant 0 : index
    %65 = vector.load %arg4[%c0_10, %c0_11] : memref<16x64xbf16, #tpu.memory_space<vmem>>, vector<16x64xbf16>
    %cst_12 = arith.constant dense<0.000000e+00> : vector<2x64xf32>
    %66 = tpu.matmul %64, %65, %cst_12 {dimension_numbers = #tpu.dot_dimension_numbers<[1], [0], [0], [1], [0, 0, 1, 1], [], []>} : vector<2x16xbf16>, vector<16x64xbf16>, vector<2x64xf32> -> vector<2x64xf32>
    %c0_13 = arith.constant 0 : index
    %c0_14 = arith.constant 0 : index
    %67 = vector.load %arg5[%c0_13, %c0_14] : memref<1x64xf32, #tpu.memory_space<vmem>>, vector<1x64xf32>
    %68 = vector.broadcast %67 : vector<1x64xf32> to vector<2x64xf32>
    %69 = arith.addf %66, %68 : vector<2x64xf32>
    %cst_15 = arith.constant 0.000000e+00 : f32
    %70 = vector.broadcast %cst_15 : f32 to vector<2x64xf32>
    %71 = arith.maximumf %69, %70 : vector<2x64xf32>
    %72 = arith.truncf %63 : vector<2x512xf32> to vector<2x512xbf16>
    %c0_16 = arith.constant 0 : index
    %c0_17 = arith.constant 0 : index
    %73 = vector.load %arg6[%c0_16, %c0_17] : memref<512x16xbf16, #tpu.memory_space<vmem>>, vector<512x16xbf16>
    %cst_18 = arith.constant dense<0.000000e+00> : vector<2x16xf32>
    %74 = tpu.matmul %72, %73, %cst_18 {dimension_numbers = #tpu.dot_dimension_numbers<[1], [0], [0], [1], [0, 0, 1, 1], [], []>} : vector<2x512xbf16>, vector<512x16xbf16>, vector<2x16xf32> -> vector<2x16xf32>
    %75 = arith.truncf %71 : vector<2x64xf32> to vector<2x64xbf16>
    %c0_19 = arith.constant 0 : index
    %c0_20 = arith.constant 0 : index
    %76 = vector.load %arg7[%c0_19, %c0_20] : memref<64x16xbf16, #tpu.memory_space<vmem>>, vector<64x16xbf16>
    %cst_21 = arith.constant dense<0.000000e+00> : vector<2x16xf32>
    %77 = tpu.matmul %75, %76, %cst_21 {dimension_numbers = #tpu.dot_dimension_numbers<[1], [0], [0], [1], [0, 0, 1, 1], [], []>} : vector<2x64xbf16>, vector<64x16xbf16>, vector<2x16xf32> -> vector<2x16xf32>
    %78 = arith.addf %74, %77 : vector<2x16xf32>
    %c0_22 = arith.constant 0 : index
    %c0_23 = arith.constant 0 : index
    %79 = vector.load %arg8[%c0_22, %c0_23] : memref<1x16xf32, #tpu.memory_space<vmem>>, vector<1x16xf32>
    %80 = vector.broadcast %79 : vector<1x16xf32> to vector<2x16xf32>
    %81 = arith.addf %78, %80 : vector<2x16xf32>
    %cst_24 = arith.constant 0.000000e+00 : f32
    %82 = vector.broadcast %cst_24 : f32 to vector<2x16xf32>
    %83 = arith.maximumf %81, %82 : vector<2x16xf32>
    %c0_25 = arith.constant 0 : index
    %c0_26 = arith.constant 0 : index
    %84 = vector.load %arg9[%c0_25, %c0_26] : memref<1x16xf32, #tpu.memory_space<vmem>>, vector<1x16xf32>
    %85 = vector.broadcast %84 : vector<1x16xf32> to vector<2x16xf32>
    %86 = arith.mulf %83, %85 : vector<2x16xf32>
    %cst_27 = arith.constant dense<0.000000e+00> : vector<2xf32>
    %87 = vector.multi_reduction <add>, %86, %cst_27 [1] : vector<2x16xf32> to vector<2xf32>
    %88 = vector.shape_cast %87 : vector<2xf32> to vector<2x1xf32>
    %c0_28 = arith.constant 0 : index
    %c0_29 = arith.constant 0 : index
    %89 = vector.load %arg10[%c0_28, %c0_29] : memref<1x1xf32, #tpu.memory_space<vmem>>, vector<1x1xf32>
    %90 = vector.broadcast %89 : vector<1x1xf32> to vector<2x1xf32>
    %91 = arith.addf %88, %90 : vector<2x1xf32>
    %c0_30 = arith.constant 0 : index
    %c0_31 = arith.constant 0 : index
    %92 = vector.load %arg11[%c0_30, %c0_31] : memref<2x1xf32, #tpu.memory_space<vmem>>, vector<2x1xf32>
    tpu.vector_store %arg11[%c0_30, %c0_31], %91 {strides = array<i32>} : memref<2x1xf32, #tpu.memory_space<vmem>>, vector<2x1xf32>,
    return
  }
}

</mosaic_0001>

<llo_original>
// kernel: three_inputs_net_forward.1
$region0: #{three_inputs_net_forward.1}
  #allocation0 [shape = 'u32[]', space=smem, size = 0x4, offset = 0x4, fixed_abs, tag = 'smem constant byte address 0x4 - core index']
  #allocation1 [shape = 'u32[144,128]{1,0:T(1,128)}', space=vmem, size = 0x12000, scoped, tag = 'internal scratch']
  #allocation2 [shape = 'f32[1,1]{1,0:T(1,128)S(1)}', space=vmem, size = 0x200, scoped, tag = 'scoped memory for three_inputs_net_forward.1']
  %s0 = inlined_call_operand.vmem [shape: s32[32,3], index: 0, kind: input, shape index: {}]
  %s1 = inlined_call_operand.vmem [shape: bf16[2,16], index: 1, kind: input, shape index: {}]
  %s2 = inlined_call_operand.vmem [shape: bf16[150,128], index: 2, kind: input, shape index: {}]
  %s3 = inlined_call_operand.vmem [shape: f32[1,128], index: 3, kind: input, shape index: {}]
  %s4 = inlined_call_operand.vmem [shape: bf16[16,64], index: 4, kind: input, shape index: {}]
  %s5 = inlined_call_operand.vmem [shape: f32[1,64], index: 5, kind: input, shape index: {}]
  %s6 = inlined_call_operand.vmem [shape: bf16[512,16], index: 6, kind: input, shape index: {}]
  %s7 = inlined_call_operand.vmem [shape: bf16[64,16], index: 7, kind: input, shape index: {}]
  %s8 = inlined_call_operand.vmem [shape: f32[1,16], index: 8, kind: input, shape index: {}]
  %s9 = inlined_call_operand.vmem [shape: f32[1,16], index: 9, kind: input, shape index: {}]
  %s10 = inlined_call_operand.<no memory space> [shape: f32[1,1], index: 10, kind: input, shape index: {}]
  %s11 = inlined_call_operand.vmem [shape: f32[2,1], index: 11, kind: output, shape index: {}]
  %s12 = sld [smem:[#allocation0]]
  $region54: #{three_inputs_net_forward.1} parent=0
    _
  %s14 = ssub.s32 1, %s12
  %s15 = scalar_select 0, %s14, %s12
  %v16 = vstv %s10
  %17 = vst [vmem:[#allocation2] sm:$0x1] %v16
  // Predicated region
  $region2: #{three_inputs_net_forward.1} parent=0 // pred_check
    _
  $region3: #{three_inputs_net_forward.1} parent=0 // pred_check_branch
    %19 = sbr.rel (0) target = $region5
  $region4: #{three_inputs_net_forward.1} parent=0 // pred_region
    _
  $region5: #{three_inputs_net_forward.1} parent=0 // pred_fallthru
    _
  // Predicated region
  $region6: #{three_inputs_net_forward.1} parent=0 // pred_check
    _
  $region7: #{three_inputs_net_forward.1} parent=0 // pred_check_branch
    %21 = sbr.rel (0) target = $region9
  $region8: #{three_inputs_net_forward.1} parent=0 // pred_region
    _
  $region9: #{three_inputs_net_forward.1} parent=0 // pred_fallthru
    _
  // Predicated region
  $region10: #{three_inputs_net_forward.1} parent=0 // pred_check
    _
  $region11: #{three_inputs_net_forward.1} parent=0 // pred_check_branch
    %23 = sbr.rel (0) target = $region13
  $region12: #{three_inputs_net_forward.1} parent=0 // pred_region
    _
  $region13: #{three_inputs_net_forward.1} parent=0 // pred_fallthru
    _
  // Predicated region
  $region14: #{three_inputs_net_forward.1} parent=0 // pred_check
    _
  $region15: #{three_inputs_net_forward.1} parent=0 // pred_check_branch
    %25 = sbr.rel (0) target = $region17
  $region16: #{three_inputs_net_forward.1} parent=0 // pred_region
    _
  $region17: #{three_inputs_net_forward.1} parent=0 // pred_fallthru
    _
  // Predicated region
  $region18: #{three_inputs_net_forward.1} parent=0 // pred_check
    _
  $region19: #{three_inputs_net_forward.1} parent=0 // pred_check_branch
    %27 = sbr.rel (0) target = $region21
  $region20: #{three_inputs_net_forward.1} parent=0 // pred_region
    _
  $region21: #{three_inputs_net_forward.1} parent=0 // pred_fallthru
    _
  // Predicated region
  $region22: #{three_inputs_net_forward.1} parent=0 // pred_check
    _
  $region23: #{three_inputs_net_forward.1} parent=0 // pred_check_branch
    %29 = sbr.rel (0) target = $region25
  $region24: #{three_inputs_net_forward.1} parent=0 // pred_region
    _
  $region25: #{three_inputs_net_forward.1} parent=0 // pred_fallthru
    _
  // Predicated region
  $region26: #{three_inputs_net_forward.1} parent=0 // pred_check
    _
  $region27: #{three_inputs_net_forward.1} parent=0 // pred_check_branch
    %31 = sbr.rel (0) target = $region29
  $region28: #{three_inputs_net_forward.1} parent=0 // pred_region
    _
  $region29: #{three_inputs_net_forward.1} parent=0 // pred_fallthru
    _
  // Predicated region
  $region30: #{three_inputs_net_forward.1} parent=0 // pred_check
    _
  $region31: #{three_inputs_net_forward.1} parent=0 // pred_check_branch
    %33 = sbr.rel (0) target = $region33
  $region32: #{three_inputs_net_forward.1} parent=0 // pred_region
    _
  $region33: #{three_inputs_net_forward.1} parent=0 // pred_fallthru
    _
  // Predicated region
  $region34: #{three_inputs_net_forward.1} parent=0 // pred_check
    _
  $region35: #{three_inputs_net_forward.1} parent=0 // pred_check_branch
    %35 = sbr.rel (0) target = $region37
  $region36: #{three_inputs_net_forward.1} parent=0 // pred_region
    _
  $region37: #{three_inputs_net_forward.1} parent=0 // pred_fallthru
    _
  // Predicated region
  $region38: #{three_inputs_net_forward.1} parent=0 // pred_check
    _
  $region39: #{three_inputs_net_forward.1} parent=0 // pred_check_branch
    %37 = sbr.rel (0) target = $region41
  $region40: #{three_inputs_net_forward.1} parent=0 // pred_region
    _
  $region41: #{three_inputs_net_forward.1} parent=0 // pred_fallthru
    _
  // Predicated region
  $region42: #{three_inputs_net_forward.1} parent=0 // pred_check
    _
  $region43: #{three_inputs_net_forward.1} parent=0 // pred_check_branch
    %39 = sbr.rel (0) target = $region45
  $region44: #{three_inputs_net_forward.1} parent=0 // pred_region
    _
  $region45: #{three_inputs_net_forward.1} parent=0 // pred_fallthru
    _
  %v41 = vld [vmem:[%s0] sm:$0xff]
  %v42 = vld [vmem:[%s0 + $0x8] sm:$0xff]
  %v43 = vld [vmem:[%s0 + $0x10] sm:$0xff]
  %v44 = vld [vmem:[%s0 + $0x18] sm:$0xff]
  %v45 = vlaneseq
  %v46 = vand.u32 %v45, 127
  %v47 = vadd.s32 %v46, 128
  %48 = vset.pattern.permute.xlu0 0
  %49 = vperm.xlu0 %48, %v41
  %v50 = vpop.permute.xlu0 %49
  %51 = vset.pattern.permute.xlu0 0
  %52 = vperm.xlu0 %51, %v42
  %v53 = vpop.permute.xlu0 %52
  %54 = vset.pattern.permute.xlu0 0
  %55 = vperm.xlu0 %54, %v43
  %v56 = vpop.permute.xlu0 %55
  %57 = vset.pattern.permute.xlu0 0
  %58 = vperm.xlu0 %57, %v44
  %v59 = vpop.permute.xlu0 %58
  %vm60 = vcmp.eq.s32.totalorder %v46, %v50
  %vm61 = vcmp.eq.s32.totalorder %v47, %v50
  %vm62 = vcmp.eq.s32.totalorder %v46, %v53
  %vm63 = vcmp.eq.s32.totalorder %v47, %v53
  %vm64 = vcmp.eq.s32.totalorder %v46, %v56
  %vm65 = vcmp.eq.s32.totalorder %v47, %v56
  %vm66 = vcmp.eq.s32.totalorder %v46, %v59
  %vm67 = vcmp.eq.s32.totalorder %v47, %v59
  %68 = vset.pattern.permute.xlu0 1
  %69 = vperm.xlu0 %68, %v41
  %v70 = vpop.permute.xlu0 %69
  %71 = vset.pattern.permute.xlu0 1
  %72 = vperm.xlu0 %71, %v42
  %v73 = vpop.permute.xlu0 %72
  %74 = vset.pattern.permute.xlu0 1
  %75 = vperm.xlu0 %74, %v43
  %v76 = vpop.permute.xlu0 %75
  %77 = vset.pattern.permute.xlu0 1
  %78 = vperm.xlu0 %77, %v44
  %v79 = vpop.permute.xlu0 %78
  %vm80 = vcmp.eq.s32.totalorder %v46, %v70
  %vm81 = vcmp.eq.s32.totalorder %v47, %v70
  %vm82 = vcmp.eq.s32.totalorder %v46, %v73
  %vm83 = vcmp.eq.s32.totalorder %v47, %v73
  %vm84 = vcmp.eq.s32.totalorder %v46, %v76
  %vm85 = vcmp.eq.s32.totalorder %v47, %v76
  %vm86 = vcmp.eq.s32.totalorder %v46, %v79
  %vm87 = vcmp.eq.s32.totalorder %v47, %v79
  %vm88 = vmor %vm60, %vm80
  %vm89 = vmor %vm61, %vm81
  %vm90 = vmor %vm62, %vm82
  %vm91 = vmor %vm63, %vm83
  %vm92 = vmor %vm64, %vm84
  %vm93 = vmor %vm65, %vm85
  %vm94 = vmor %vm66, %vm86
  %vm95 = vmor %vm67, %vm87
  %96 = vset.pattern.permute.xlu0 2
  %97 = vperm.xlu0 %96, %v41
  %v98 = vpop.permute.xlu0 %97
  %99 = vset.pattern.permute.xlu0 2
  %100 = vperm.xlu0 %99, %v42
  %v101 = vpop.permute.xlu0 %100
  %102 = vset.pattern.permute.xlu0 2
  %103 = vperm.xlu0 %102, %v43
  %v104 = vpop.permute.xlu0 %103
  %105 = vset.pattern.permute.xlu0 2
  %106 = vperm.xlu0 %105, %v44
  %v107 = vpop.permute.xlu0 %106
  %vm108 = vcmp.eq.s32.totalorder %v46, %v98
  %vm109 = vcmp.eq.s32.totalorder %v47, %v98
  %vm110 = vcmp.eq.s32.totalorder %v46, %v101
  %vm111 = vcmp.eq.s32.totalorder %v47, %v101
  %vm112 = vcmp.eq.s32.totalorder %v46, %v104
  %vm113 = vcmp.eq.s32.totalorder %v47, %v104
  %vm114 = vcmp.eq.s32.totalorder %v46, %v107
  %vm115 = vcmp.eq.s32.totalorder %v47, %v107
  %vm116 = vmor %vm88, %vm108
  %vm117 = vmor %vm89, %vm109
  %vm118 = vmor %vm90, %vm110
  %vm119 = vmor %vm91, %vm111
  %vm120 = vmor %vm92, %vm112
  %vm121 = vmor %vm93, %vm113
  %vm122 = vmor %vm94, %vm114
  %vm123 = vmor %vm95, %vm115
  %v124 = vsel %vm116, 1.0, 0.0
  %v125 = vsel %vm117, 1.0, 0.0
  %v126 = vsel %vm118, 1.0, 0.0
  %v127 = vsel %vm119, 1.0, 0.0
  %v128 = vsel %vm120, 1.0, 0.0
  %v129 = vsel %vm121, 1.0, 0.0
  %v130 = vsel %vm122, 1.0, 0.0
  %v131 = vsel %vm123, 1.0, 0.0
  %v132 = vpack.c.bf16 %v126, %v124
  %v133 = vpack.c.bf16 %v127, %v125
  %v134 = vpack.c.bf16 %v130, %v128
  %v135 = vpack.c.bf16 %v131, %v129
  %v136 = vld [vmem:[%s2] sm:$0xf]
  %v137 = vld [vmem:[%s2 + $0x4] sm:$0xf]
  %v138 = vld [vmem:[%s2 + $0x8] sm:$0xf]
  %v139 = vld [vmem:[%s2 + $0xc] sm:$0xf]
  %v140 = vld [vmem:[%s2 + $0x10] sm:$0xf]
  %v141 = vld [vmem:[%s2 + $0x14] sm:$0xf]
  %v142 = vld [vmem:[%s2 + $0x18] sm:$0xf]
  %v143 = vld [vmem:[%s2 + $0x1c] sm:$0xf]
  %v144 = vld [vmem:[%s2 + $0x20] sm:$0xf]
  %v145 = vld [vmem:[%s2 + $0x24] sm:$0xf]
  %v146 = vld [vmem:[%s2 + $0x28] sm:$0xf]
  %v147 = vld [vmem:[%s2 + $0x2c] sm:$0xf]
  %v148 = vld [vmem:[%s2 + $0x30] sm:$0xf]
  %v149 = vld [vmem:[%s2 + $0x34] sm:$0xf]
  %v150 = vld [vmem:[%s2 + $0x38] sm:$0xf]
  %v151 = vld [vmem:[%s2 + $0x3c] sm:$0xf]
  %v152 = vld [vmem:[%s2 + $0x40] sm:$0xf]
  %v153 = vld [vmem:[%s2 + $0x44] sm:$0xf]
  %v154 = vld [vmem:[%s2 + $0x48] sm:$0x7]
  %v155 = vld [vmem:[%s3] sm:$0x1]
  %v157 = vlaneseq
  %v158 = vshrl.u32 %v157, 7
  %v159 = vsub.s32 0, %v158
  %v160 = vrot.slane %v155, %v159
  %v181 = vunpack.c.l.b16 %v136
  %v182 = vunpack.c.l.b16 %v137
  %v183 = vunpack.c.l.b16 %v138
  %v184 = vunpack.c.l.b16 %v139
  %v185 = vunpack.c.l.b16 %v140
  %v186 = vunpack.c.l.b16 %v141
  %v187 = vunpack.c.l.b16 %v142
  %v188 = vunpack.c.l.b16 %v143
  %v189 = vunpack.c.l.b16 %v144
  %v190 = vunpack.c.l.b16 %v145
  %v191 = vunpack.c.l.b16 %v146
  %v192 = vunpack.c.l.b16 %v147
  %v193 = vunpack.c.l.b16 %v148
  %v194 = vunpack.c.l.b16 %v149
  %v195 = vunpack.c.l.b16 %v150
  %v196 = vunpack.c.l.b16 %v151
  %v197 = vunpack.c.l.b16 %v152
  %v198 = vunpack.c.l.b16 %v153
  %v199 = vunpack.c.l.b16 %v154
  %v200 = vpack.c.b16 %v182, %v181
  %v201 = vpack.c.b16 %v184, %v183
  %v202 = vpack.c.b16 %v186, %v185
  %v203 = vpack.c.b16 %v188, %v187
  %v204 = vpack.c.b16 %v190, %v189
  %v205 = vpack.c.b16 %v192, %v191
  %v206 = vpack.c.b16 %v194, %v193
  %v207 = vpack.c.b16 %v196, %v195
  %v208 = vpack.c.b16 %v198, %v197
  %v209 = vpack.c.b16 %v199, %v199
  %vm219 = vcmask 179200
  %v221 = vsel %vm219, %v133, 0
  %v224 = vsel %vm219, %v135, 0
  %vm226 = vcmask 1042432
  %v228 = vsel %vm226, %v209, 0
  %230 = vmatprep.subr.bf16.mxu0 0
  %231 = vmatpush1.bf16.msra.mxu0 %v200
  %232 = vmatprep.subr.bf16.mxu0 0
  %233 = vmatpush1.bf16.msra.mxu0 %v201
  %234 = vmatprep.subr.bf16.mxu0 0
  %235 = vmatpush1.bf16.msra.mxu0 %v202
  %236 = vmatprep.subr.bf16.mxu0 0
  %237 = vmatpush1.bf16.msra.mxu0 %v203
  %238 = vmatprep.subr.bf16.mxu0 0
  %239 = vmatpush1.bf16.msra.mxu0 %v204
  %240 = vmatprep.subr.bf16.mxu0 0
  %241 = vmatpush1.bf16.msra.mxu0 %v205
  %242 = vmatprep.subr.bf16.mxu0 0
  %243 = vmatpush1.bf16.msra.mxu0 %v206
  %244 = vmatprep.subr.bf16.mxu0 0
  %245 = vmatpush1.bf16.msra.mxu0 %v207
  %246 = vmatprep.subr.bf16.mxu0 0
  %247 = vmatpush1.bf16.msra.mxu0 %v208
  %248 = vmatprep.subr.bf16.mxu0 0
  %249 = vmatpush1.bf16.msra.mxu0 %v228
  %250 = vmatprep.subr.bf16.mxu0 0
  %251 = vmatpush1.bf16.msra.mxu0 0
  %252 = vmatprep.subr.bf16.mxu0 0
  %253 = vmatpush1.bf16.msra.mxu0 0
  %254 = vmatprep.subr.bf16.mxu0 0
  %255 = vmatpush1.bf16.msra.mxu0 0
  %256 = vmatprep.subr.bf16.mxu0 0
  %257 = vmatpush1.bf16.msra.mxu0 0
  %258 = vmatprep.subr.bf16.mxu0 0
  %259 = vmatpush1.bf16.msra.mxu0 0
  %260 = vmatprep.subr.bf16.mxu0 0
  %261 = vmatpush1.bf16.msra.mxu0 0
  %262 = vmatprep.mubr.bf16.mxu0 %v221
  %263 = vmatmul.mubr.bf16.gmra.mrb[0].mxu0 %v132
  %v264 = vpop.f32.mrb[0].mxu0
  %v265 = vadd.f32 %v160, %v264
  %v266 = vpop.f32.mrb[0].mxu0
  %v267 = vpop.f32.mrb[0].mxu0
  %v268 = vadd.f32 %v160, %v267
  %v269 = vpop.f32.mrb[0].mxu0
  %270 = vmatprep.mubr.bf16.mxu0 %v224
  %271 = vmatmul.mubr.bf16.gmra.mrb[0].mxu0 %v134
  %v272 = vpop.f32.mrb[0].mxu0
  %v273 = vadd.f32 %v160, %v272
  %v274 = vpop.f32.mrb[0].mxu0
  %v275 = vpop.f32.mrb[0].mxu0
  %v276 = vadd.f32 %v160, %v275
  %v277 = vpop.f32.mrb[0].mxu0
  %278 = vdwg.mxu0
  %v279 = vmax.f32 %v265, 0.0
  %v280 = vmax.f32 %v268, 0.0
  %v281 = vmax.f32 %v273, 0.0
  %v282 = vmax.f32 %v276, 0.0
  %vm283 = vcmp.lt.s32.totalorder %v46, 64
  %v285 = vrot.slane %v279, 2
  %v287 = vmax.f32 %v279, %v285
  %v289 = vrot.slane %v280, 2
  %v291 = vmax.f32 %v280, %v289
  %v293 = vrot.slane %v281, 4
  %v295 = vmax.f32 %v291, %v293
  %v297 = vrot.slane %v295, 4
  %v299 = vsel %vm283, %v287, %v297
  %v300 = vrot.slane %v281, 2
  %v302 = vmax.f32 %v281, %v300
  %v303 = vmax.f32 %v302, %v293
  %v305 = vrot.slane %v303, 6
  %v307 = vsel %vm283, %v287, %v305
  %v308 = vmax.f32 %v279, %v289
  %v310 = vrot.slane %v282, 2
  %v312 = vmax.f32 %v281, %v310
  %v313 = vrot.slane %v282, 4
  %v315 = vmax.f32 %v312, %v313
  %v316 = vsel %vm283, %v308, %v315
  %v317 = vmax.f32 %v282, %v310
  %v318 = vmax.f32 %v317, %v313
  %v320 = vrot.slane %v318, 2
  %v322 = vsel %vm283, %v291, %v320
  %v324 = vrot.slane %v307, 2
  %v327 = vrot.slane %v316, 6
  %v329 = vld [vmem:[%s1] sm:$0x1]
  %v330 = vld [vmem:[%s4] sm:$0xf]
  %v331 = vld [vmem:[%s4 + $0x4] sm:$0xf]
  %v332 = vld [vmem:[%s5] sm:$0x1]
  %v334 = vlaneseq
  %v335 = vshrl.u32 %v334, 7
  %v336 = vsub.s32 0, %v335
  %v337 = vrot.slane %v332, %v336
  %v341 = vunpack.c.l.b16 %v330
  %v342 = vunpack.c.l.b16 %v331
  %v343 = vpack.c.b16 %v342, %v341
  %vm345 = vcmask 130048
  %v347 = vsel %vm345, %v329, 0
  %349 = vmatprep.subr.bf16.mxu0 0
  %350 = vmatpush1.bf16.msra.mxu0 %v343
  %351 = vmatprep.subr.bf16.mxu0 0
  %352 = vmatpush1.bf16.msra.mxu0 0
  %353 = vmatprep.subr.bf16.mxu0 0
  %354 = vmatpush1.bf16.msra.mxu0 0
  %355 = vmatprep.subr.bf16.mxu0 0
  %356 = vmatpush1.bf16.msra.mxu0 0
  %357 = vmatprep.subr.bf16.mxu0 0
  %358 = vmatpush1.bf16.msra.mxu0 0
  %359 = vmatprep.subr.bf16.mxu0 0
  %360 = vmatpush1.bf16.msra.mxu0 0
  %361 = vmatprep.subr.bf16.mxu0 0
  %362 = vmatpush1.bf16.msra.mxu0 0
  %363 = vmatprep.subr.bf16.mxu0 0
  %364 = vmatpush1.bf16.msra.mxu0 0
  %365 = vmatprep.subr.bf16.mxu0 0
  %366 = vmatpush1.bf16.msra.mxu0 0
  %367 = vmatprep.subr.bf16.mxu0 0
  %368 = vmatpush1.bf16.msra.mxu0 0
  %369 = vmatprep.subr.bf16.mxu0 0
  %370 = vmatpush1.bf16.msra.mxu0 0
  %371 = vmatprep.subr.bf16.mxu0 0
  %372 = vmatpush1.bf16.msra.mxu0 0
  %373 = vmatprep.subr.bf16.mxu0 0
  %374 = vmatpush1.bf16.msra.mxu0 0
  %375 = vmatprep.subr.bf16.mxu0 0
  %376 = vmatpush1.bf16.msra.mxu0 0
  %377 = vmatprep.subr.bf16.mxu0 0
  %378 = vmatpush1.bf16.msra.mxu0 0
  %379 = vmatprep.subr.bf16.mxu0 0
  %380 = vmatpush1.bf16.msra.mxu0 0
  %381 = vmatprep.mubr.bf16.mxu0 0
  %382 = vmatmul.mubr.bf16.gmra.mrb[0].mxu0 %v347
  %v383 = vpop.f32.mrb[0].mxu0
  %v384 = vadd.f32 %v337, %v383
  %v385 = vpop.f32.mrb[0].mxu0
  %v386 = vpop.f32.mrb[0].mxu0
  %v387 = vpop.f32.mrb[0].mxu0
  %388 = vdwg.mxu0
  %v389 = vmax.f32 %v384, 0.0
  %v390 = vpack.c.bf16 %v299, %v299
  %v391 = vpack.c.bf16 %v324, %v324
  %v392 = vpack.c.bf16 %v327, %v327
  %v393 = vpack.c.bf16 %v322, %v322
  %v394 = vld [vmem:[%s6] sm:$0xf]
  %v395 = vld [vmem:[%s6 + $0x4] sm:$0xf]
  %v396 = vld [vmem:[%s6 + $0x8] sm:$0xf]
  %v397 = vld [vmem:[%s6 + $0xc] sm:$0xf]
  %v398 = vld [vmem:[%s6 + $0x10] sm:$0xf]
  %v399 = vld [vmem:[%s6 + $0x14] sm:$0xf]
  %v400 = vld [vmem:[%s6 + $0x18] sm:$0xf]
  %v401 = vld [vmem:[%s6 + $0x1c] sm:$0xf]
  %v402 = vld [vmem:[%s6 + $0x20] sm:$0xf]
  %v403 = vld [vmem:[%s6 + $0x24] sm:$0xf]
  %v404 = vld [vmem:[%s6 + $0x28] sm:$0xf]
  %v405 = vld [vmem:[%s6 + $0x2c] sm:$0xf]
  %v406 = vld [vmem:[%s6 + $0x30] sm:$0xf]
  %v407 = vld [vmem:[%s6 + $0x34] sm:$0xf]
  %v408 = vld [vmem:[%s6 + $0x38] sm:$0xf]
  %v409 = vld [vmem:[%s6 + $0x3c] sm:$0xf]
  %v410 = vld [vmem:[%s6 + $0x40] sm:$0xf]
  %v411 = vld [vmem:[%s6 + $0x44] sm:$0xf]
  %v412 = vld [vmem:[%s6 + $0x48] sm:$0xf]
  %v413 = vld [vmem:[%s6 + $0x4c] sm:$0xf]
  %v414 = vld [vmem:[%s6 + $0x50] sm:$0xf]
  %v415 = vld [vmem:[%s6 + $0x54] sm:$0xf]
  %v416 = vld [vmem:[%s6 + $0x58] sm:$0xf]
  %v417 = vld [vmem:[%s6 + $0x5c] sm:$0xf]
  %v418 = vld [vmem:[%s6 + $0x60] sm:$0xf]
  %v419 = vld [vmem:[%s6 + $0x64] sm:$0xf]
  %v420 = vld [vmem:[%s6 + $0x68] sm:$0xf]
  %v421 = vld [vmem:[%s6 + $0x6c] sm:$0xf]
  %v422 = vld [vmem:[%s6 + $0x70] sm:$0xf]
  %v423 = vld [vmem:[%s6 + $0x74] sm:$0xf]
  %v424 = vld [vmem:[%s6 + $0x78] sm:$0xf]
  %v425 = vld [vmem:[%s6 + $0x7c] sm:$0xf]
  %v426 = vld [vmem:[%s6 + $0x80] sm:$0xf]
  %v427 = vld [vmem:[%s6 + $0x84] sm:$0xf]
  %v428 = vld [vmem:[%s6 + $0x88] sm:$0xf]
  %v429 = vld [vmem:[%s6 + $0x8c] sm:$0xf]
  %v430 = vld [vmem:[%s6 + $0x90] sm:$0xf]
  %v431 = vld [vmem:[%s6 + $0x94] sm:$0xf]
  %v432 = vld [vmem:[%s6 + $0x98] sm:$0xf]
  %v433 = vld [vmem:[%s6 + $0x9c] sm:$0xf]
  %v434 = vld [vmem:[%s6 + $0xa0] sm:$0xf]
  %v435 = vld [vmem:[%s6 + $0xa4] sm:$0xf]
  %v436 = vld [vmem:[%s6 + $0xa8] sm:$0xf]
  %v437 = vld [vmem:[%s6 + $0xac] sm:$0xf]
  %v438 = vld [vmem:[%s6 + $0xb0] sm:$0xf]
  %v439 = vld [vmem:[%s6 + $0xb4] sm:$0xf]
  %v440 = vld [vmem:[%s6 + $0xb8] sm:$0xf]
  %v441 = vld [vmem:[%s6 + $0xbc] sm:$0xf]
  %v442 = vld [vmem:[%s6 + $0xc0] sm:$0xf]
  %v443 = vld [vmem:[%s6 + $0xc4] sm:$0xf]
  %v444 = vld [vmem:[%s6 + $0xc8] sm:$0xf]
  %v445 = vld [vmem:[%s6 + $0xcc] sm:$0xf]
  %v446 = vld [vmem:[%s6 + $0xd0] sm:$0xf]
  %v447 = vld [vmem:[%s6 + $0xd4] sm:$0xf]
  %v448 = vld [vmem:[%s6 + $0xd8] sm:$0xf]
  %v449 = vld [vmem:[%s6 + $0xdc] sm:$0xf]
  %v450 = vld [vmem:[%s6 + $0xe0] sm:$0xf]
  %v451 = vld [vmem:[%s6 + $0xe4] sm:$0xf]
  %v452 = vld [vmem:[%s6 + $0xe8] sm:$0xf]
  %v453 = vld [vmem:[%s6 + $0xec] sm:$0xf]
  %v454 = vld [vmem:[%s6 + $0xf0] sm:$0xf]
  %v455 = vld [vmem:[%s6 + $0xf4] sm:$0xf]
  %v456 = vld [vmem:[%s6 + $0xf8] sm:$0xf]
  %v457 = vld [vmem:[%s6 + $0xfc] sm:$0xf]
  %v458 = vpack.c.bf16 %v389, %v389
  %v459 = vld [vmem:[%s7] sm:$0xf]
  %v460 = vld [vmem:[%s7 + $0x4] sm:$0xf]
  %v461 = vld [vmem:[%s7 + $0x8] sm:$0xf]
  %v462 = vld [vmem:[%s7 + $0xc] sm:$0xf]
  %v463 = vld [vmem:[%s7 + $0x10] sm:$0xf]
  %v464 = vld [vmem:[%s7 + $0x14] sm:$0xf]
  %v465 = vld [vmem:[%s7 + $0x18] sm:$0xf]
  %v466 = vld [vmem:[%s7 + $0x1c] sm:$0xf]
  %v475 = vunpack.c.l.b16 %v459
  %v476 = vunpack.c.l.b16 %v460
  %v477 = vunpack.c.l.b16 %v461
  %v478 = vunpack.c.l.b16 %v462
  %v479 = vunpack.c.l.b16 %v463
  %v480 = vunpack.c.l.b16 %v464
  %v481 = vunpack.c.l.b16 %v465
  %v482 = vunpack.c.l.b16 %v466
  %v483 = vpack.c.b16 %v476, %v475
  %v484 = vpack.c.b16 %v478, %v477
  %v485 = vpack.c.b16 %v480, %v479
  %v486 = vpack.c.b16 %v482, %v481
  %vm491 = vcmask 523264
  %v493 = vsel %vm491, %v458, 0
  %495 = vmatprep.subr.bf16.mxu0 0
  %496 = vmatpush1.bf16.msra.mxu0 %v483
  %497 = vmatprep.subr.bf16.mxu0 0
  %498 = vmatpush1.bf16.msra.mxu0 %v484
  %499 = vmatprep.subr.bf16.mxu0 0
  %500 = vmatpush1.bf16.msra.mxu0 %v485
  %501 = vmatprep.subr.bf16.mxu0 0
  %502 = vmatpush1.bf16.msra.mxu0 %v486
  %503 = vmatprep.subr.bf16.mxu0 0
  %504 = vmatpush1.bf16.msra.mxu0 0
  %505 = vmatprep.subr.bf16.mxu0 0
  %506 = vmatpush1.bf16.msra.mxu0 0
  %507 = vmatprep.subr.bf16.mxu0 0
  %508 = vmatpush1.bf16.msra.mxu0 0
  %509 = vmatprep.subr.bf16.mxu0 0
  %510 = vmatpush1.bf16.msra.mxu0 0
  %511 = vmatprep.subr.bf16.mxu0 0
  %512 = vmatpush1.bf16.msra.mxu0 0
  %513 = vmatprep.subr.bf16.mxu0 0
  %514 = vmatpush1.bf16.msra.mxu0 0
  %515 = vmatprep.subr.bf16.mxu0 0
  %516 = vmatpush1.bf16.msra.mxu0 0
  %517 = vmatprep.subr.bf16.mxu0 0
  %518 = vmatpush1.bf16.msra.mxu0 0
  %519 = vmatprep.subr.bf16.mxu0 0
  %520 = vmatpush1.bf16.msra.mxu0 0
  %521 = vmatprep.subr.bf16.mxu0 0
  %522 = vmatpush1.bf16.msra.mxu0 0
  %523 = vmatprep.subr.bf16.mxu0 0
  %524 = vmatpush1.bf16.msra.mxu0 0
  %525 = vmatprep.subr.bf16.mxu0 0
  %526 = vmatpush1.bf16.msra.mxu0 0
  %527 = vmatprep.mubr.bf16.mxu0 0
  %528 = vmatmul.mubr.bf16.gmra.mrb[0].mxu0 %v493
  %v529 = vpop.f32.mrb[0].mxu0
  %v530 = vadd.f32 0.0, %v529
  %v531 = vpop.f32.mrb[0].mxu0
  %v532 = vpop.f32.mrb[0].mxu0
  %v533 = vpop.f32.mrb[0].mxu0
  %534 = vdwg.mxu0
  %v599 = vunpack.c.l.b16 %v394
  %v600 = vunpack.c.l.b16 %v395
  %v601 = vunpack.c.l.b16 %v396
  %v602 = vunpack.c.l.b16 %v397
  %v603 = vunpack.c.l.b16 %v398
  %v604 = vunpack.c.l.b16 %v399
  %v605 = vunpack.c.l.b16 %v400
  %v606 = vunpack.c.l.b16 %v401
  %v607 = vunpack.c.l.b16 %v402
  %v608 = vunpack.c.l.b16 %v403
  %v609 = vunpack.c.l.b16 %v404
  %v610 = vunpack.c.l.b16 %v405
  %v611 = vunpack.c.l.b16 %v406
  %v612 = vunpack.c.l.b16 %v407
  %v613 = vunpack.c.l.b16 %v408
  %v614 = vunpack.c.l.b16 %v409
  %v615 = vunpack.c.l.b16 %v410
  %v616 = vunpack.c.l.b16 %v411
  %v617 = vunpack.c.l.b16 %v412
  %v618 = vunpack.c.l.b16 %v413
  %v619 = vunpack.c.l.b16 %v414
  %v620 = vunpack.c.l.b16 %v415
  %v621 = vunpack.c.l.b16 %v416
  %v622 = vunpack.c.l.b16 %v417
  %v623 = vunpack.c.l.b16 %v418
  %v624 = vunpack.c.l.b16 %v419
  %v625 = vunpack.c.l.b16 %v420
  %v626 = vunpack.c.l.b16 %v421
  %v627 = vunpack.c.l.b16 %v422
  %v628 = vunpack.c.l.b16 %v423
  %v629 = vunpack.c.l.b16 %v424
  %v630 = vunpack.c.l.b16 %v425
  %v631 = vunpack.c.l.b16 %v426
  %v632 = vunpack.c.l.b16 %v427
  %v633 = vunpack.c.l.b16 %v428
  %v634 = vunpack.c.l.b16 %v429
  %v635 = vunpack.c.l.b16 %v430
  %v636 = vunpack.c.l.b16 %v431
  %v637 = vunpack.c.l.b16 %v432
  %v638 = vunpack.c.l.b16 %v433
  %v639 = vunpack.c.l.b16 %v434
  %v640 = vunpack.c.l.b16 %v435
  %v641 = vunpack.c.l.b16 %v436
  %v642 = vunpack.c.l.b16 %v437
  %v643 = vunpack.c.l.b16 %v438
  %v644 = vunpack.c.l.b16 %v439
  %v645 = vunpack.c.l.b16 %v440
  %v646 = vunpack.c.l.b16 %v441
  %v647 = vunpack.c.l.b16 %v442
  %v648 = vunpack.c.l.b16 %v443
  %v649 = vunpack.c.l.b16 %v444
  %v650 = vunpack.c.l.b16 %v445
  %v651 = vunpack.c.l.b16 %v446
  %v652 = vunpack.c.l.b16 %v447
  %v653 = vunpack.c.l.b16 %v448
  %v654 = vunpack.c.l.b16 %v449
  %v655 = vunpack.c.l.b16 %v450
  %v656 = vunpack.c.l.b16 %v451
  %v657 = vunpack.c.l.b16 %v452
  %v658 = vunpack.c.l.b16 %v453
  %v659 = vunpack.c.l.b16 %v454
  %v660 = vunpack.c.l.b16 %v455
  %v661 = vunpack.c.l.b16 %v456
  %v662 = vunpack.c.l.b16 %v457
  %v663 = vpack.c.b16 %v600, %v599
  %v664 = vpack.c.b16 %v602, %v601
  %v665 = vpack.c.b16 %v604, %v603
  %v666 = vpack.c.b16 %v606, %v605
  %v667 = vpack.c.b16 %v608, %v607
  %v668 = vpack.c.b16 %v610, %v609
  %v669 = vpack.c.b16 %v612, %v611
  %v670 = vpack.c.b16 %v614, %v613
  %v671 = vpack.c.b16 %v616, %v615
  %v672 = vpack.c.b16 %v618, %v617
  %v673 = vpack.c.b16 %v620, %v619
  %v674 = vpack.c.b16 %v622, %v621
  %v675 = vpack.c.b16 %v624, %v623
  %v676 = vpack.c.b16 %v626, %v625
  %v677 = vpack.c.b16 %v628, %v627
  %v678 = vpack.c.b16 %v630, %v629
  %v679 = vpack.c.b16 %v632, %v631
  %v680 = vpack.c.b16 %v634, %v633
  %v681 = vpack.c.b16 %v636, %v635
  %v682 = vpack.c.b16 %v638, %v637
  %v683 = vpack.c.b16 %v640, %v639
  %v684 = vpack.c.b16 %v642, %v641
  %v685 = vpack.c.b16 %v644, %v643
  %v686 = vpack.c.b16 %v646, %v645
  %v687 = vpack.c.b16 %v648, %v647
  %v688 = vpack.c.b16 %v650, %v649
  %v689 = vpack.c.b16 %v652, %v651
  %v690 = vpack.c.b16 %v654, %v653
  %v691 = vpack.c.b16 %v656, %v655
  %v692 = vpack.c.b16 %v658, %v657
  %v693 = vpack.c.b16 %v660, %v659
  %v694 = vpack.c.b16 %v662, %v661
  %727 = vmatprep.subr.bf16.mxu0 0
  %728 = vmatpush1.bf16.msra.mxu0 %v663
  %729 = vmatprep.subr.bf16.mxu0 0
  %730 = vmatpush1.bf16.msra.mxu0 %v664
  %731 = vmatprep.subr.bf16.mxu0 0
  %732 = vmatpush1.bf16.msra.mxu0 %v665
  %733 = vmatprep.subr.bf16.mxu0 0
  %734 = vmatpush1.bf16.msra.mxu0 %v666
  %735 = vmatprep.subr.bf16.mxu0 0
  %736 = vmatpush1.bf16.msra.mxu0 %v667
  %737 = vmatprep.subr.bf16.mxu0 0
  %738 = vmatpush1.bf16.msra.mxu0 %v668
  %739 = vmatprep.subr.bf16.mxu0 0
  %740 = vmatpush1.bf16.msra.mxu0 %v669
  %741 = vmatprep.subr.bf16.mxu0 0
  %742 = vmatpush1.bf16.msra.mxu0 %v670
  %743 = vmatprep.subr.bf16.mxu0 0
  %744 = vmatpush1.bf16.msra.mxu0 %v671
  %745 = vmatprep.subr.bf16.mxu0 0
  %746 = vmatpush1.bf16.msra.mxu0 %v672
  %747 = vmatprep.subr.bf16.mxu0 0
  %748 = vmatpush1.bf16.msra.mxu0 %v673
  %749 = vmatprep.subr.bf16.mxu0 0
  %750 = vmatpush1.bf16.msra.mxu0 %v674
  %751 = vmatprep.subr.bf16.mxu0 0
  %752 = vmatpush1.bf16.msra.mxu0 %v675
  %753 = vmatprep.subr.bf16.mxu0 0
  %754 = vmatpush1.bf16.msra.mxu0 %v676
  %755 = vmatprep.subr.bf16.mxu0 0
  %756 = vmatpush1.bf16.msra.mxu0 %v677
  %757 = vmatprep.subr.bf16.mxu0 0
  %758 = vmatpush1.bf16.msra.mxu0 %v678
  %759 = vmatprep.mubr.bf16.mxu0 %v391
  %760 = vmatmul.mubr.bf16.gmra.mrb[0].mxu0 %v390
  %v761 = vpop.f32.mrb[0].mxu0
  %v762 = vadd.f32 %v530, %v761
  %v763 = vpop.f32.mrb[0].mxu0
  %v764 = vpop.f32.mrb[0].mxu0
  %v765 = vpop.f32.mrb[0].mxu0
  %766 = vdwg.mxu0
  %767 = vmatprep.subr.bf16.mxu0 0
  %768 = vmatpush1.bf16.msra.mxu0 %v679
  %769 = vmatprep.subr.bf16.mxu0 0
  %770 = vmatpush1.bf16.msra.mxu0 %v680
  %771 = vmatprep.subr.bf16.mxu0 0
  %772 = vmatpush1.bf16.msra.mxu0 %v681
  %773 = vmatprep.subr.bf16.mxu0 0
  %774 = vmatpush1.bf16.msra.mxu0 %v682
  %775 = vmatprep.subr.bf16.mxu0 0
  %776 = vmatpush1.bf16.msra.mxu0 %v683
  %777 = vmatprep.subr.bf16.mxu0 0
  %778 = vmatpush1.bf16.msra.mxu0 %v684
  %779 = vmatprep.subr.bf16.mxu0 0
  %780 = vmatpush1.bf16.msra.mxu0 %v685
  %781 = vmatprep.subr.bf16.mxu0 0
  %782 = vmatpush1.bf16.msra.mxu0 %v686
  %783 = vmatprep.subr.bf16.mxu0 0
  %784 = vmatpush1.bf16.msra.mxu0 %v687
  %785 = vmatprep.subr.bf16.mxu0 0
  %786 = vmatpush1.bf16.msra.mxu0 %v688
  %787 = vmatprep.subr.bf16.mxu0 0
  %788 = vmatpush1.bf16.msra.mxu0 %v689
  %789 = vmatprep.subr.bf16.mxu0 0
  %790 = vmatpush1.bf16.msra.mxu0 %v690
  %791 = vmatprep.subr.bf16.mxu0 0
  %792 = vmatpush1.bf16.msra.mxu0 %v691
  %793 = vmatprep.subr.bf16.mxu0 0
  %794 = vmatpush1.bf16.msra.mxu0 %v692
  %795 = vmatprep.subr.bf16.mxu0 0
  %796 = vmatpush1.bf16.msra.mxu0 %v693
  %797 = vmatprep.subr.bf16.mxu0 0
  %798 = vmatpush1.bf16.msra.mxu0 %v694
  %799 = vmatprep.mubr.bf16.mxu0 %v393
  %800 = vmatmul.mubr.bf16.gmra.mrb[0].mxu0 %v392
  %v801 = vpop.f32.mrb[0].mxu0
  %v802 = vadd.f32 %v762, %v801
  %v803 = vpop.f32.mrb[0].mxu0
  %v804 = vpop.f32.mrb[0].mxu0
  %v805 = vpop.f32.mrb[0].mxu0
  %806 = vdwg.mxu0
  %v807 = vld [vmem:[%s8] sm:$0x1]
  %v809 = vlaneseq
  %v810 = vshrl.u32 %v809, 7
  %v811 = vsub.s32 0, %v810
  %v812 = vrot.slane %v807, %v811
  %v814 = vadd.f32 %v802, %v812
  %v815 = vmax.f32 %v814, 0.0
  %v816 = vld [vmem:[%s9] sm:$0x1]
  %v818 = vlaneseq
  %v819 = vshrl.u32 %v818, 7
  %v820 = vsub.s32 0, %v819
  %v821 = vrot.slane %v816, %v820
  %v823 = vmul.f32 %v815, %v821
  %vm824 = vcmask 123904
  %v825 = vsel %vm824, %v823, 0.0
  %826 = vadd.xlane.f32.xlu0 %v825
  %v827 = vpop.xlane.xlu0 %826
  %v828 = vld [vmem:[#allocation2] sm:$0x1]
  %v830 = vlaneseq
  %v831 = vshrl.u32 %v830, 7
  %v832 = vsub.s32 0, %v831
  %v833 = vrot.slane %v828, %v832
  %v835 = vadd.f32 %v827, %v833
  %vm836 = vcmask 1024
  %837 = vst.msk [vmem:[%s11] sm:$0x3] %vm836, %v835
  // Predicated region
  $region46: #{three_inputs_net_forward.1} parent=0 // pred_check
    _
  $region47: #{three_inputs_net_forward.1} parent=0 // pred_check_branch
    %839 = sbr.rel (0) target = $region49
  $region48: #{three_inputs_net_forward.1} parent=0 // pred_region
    _
  $region49: #{three_inputs_net_forward.1} parent=0 // pred_fallthru
    _
  // Predicated region
  $region50: #{three_inputs_net_forward.1} parent=0 // pred_check
    _
  $region51: #{three_inputs_net_forward.1} parent=0 // pred_check_branch
    %841 = sbr.rel (0) target = $region53
  $region52: #{three_inputs_net_forward.1} parent=0 // pred_region
    _
  $region53: #{three_inputs_net_forward.1} parent=0 // pred_fallthru
    _

</llo_original>
